<compile_context>
chip_gen: v6e
topology: v6e:2x2x1
jax: 0.10.0
libtpu: 0.0.40
codegen_flags: <defaults>
</compile_context>

<pallas_src>
import functools

import jax
import jax.numpy as jnp
from jax.experimental import pallas as pl
from jax.experimental.pallas import tpu as pltpu


def _round_up(a: int, b: int) -> int:
    return ((a + b - 1) // b) * b


def _choose_tm(B: int, Np: int, M: int, max_rows: int = 2048) -> int:
    """Pick the M-tile size.

    Prefers batch-aligned tiles (tm = Bt * Np, Bt | B) so M needs no padding and
    the final reshape to (B, Np, E) is a free view, with >= 2 grid steps (v7x
    has 2 TensorCores) and <= max_rows rows per step.
    """
    cands = [bt for bt in range(1, B + 1)
             if B % bt == 0 and (bt * Np) % 8 == 0 and bt * Np <= max_rows]
    multi = [bt for bt in cands if bt < B]          # >= 2 grid steps
    if multi:
        return max(multi) * Np
    if cands and M <= max_rows:                     # tiny problem: one tile is fine
        return max(cands) * Np
    # Fallback: generic split (introduces M padding, sliced off at the end).
    return min(max_rows, _round_up(max(1, (M + 1) // 2), 8))


def _patch_embed_kernel(x_ref, w_ref, b_ref, o_ref):
    # MXU matmul with f32 accumulation; bias add + dtype cast in the epilogue.
    acc = jnp.dot(x_ref[...], w_ref[...], preferred_element_type=jnp.float32)
    o_ref[...] = (acc + b_ref[...]).astype(o_ref.dtype)


@functools.partial(
    jax.jit, static_argnames=("patch_size", "compute_dtype", "out_dtype", "tm"))
def patch_embedding(x, weight, bias, *, patch_size, compute_dtype=jnp.bfloat16,
                    out_dtype=None, tm=None):
    """ViT patch embedding.

    x: (B, C, H, W) NCHW; weight: (E, C, P, P) (nn.Conv2d layout); bias: (E,).
    Returns (B, (H//P)*(W//P), E) in out_dtype (default: compute_dtype).
    """
    B, C, H, W = x.shape
    E = weight.shape[0]
    P = patch_size
    assert H % P == 0 and W % P == 0
    nH, nW = H // P, W // P
    Np = nH * nW
    K = C * P * P
    M = B * Np

    out_dtype = jnp.dtype(compute_dtype if out_dtype is None else out_dtype)
    in_bytes = jnp.dtype(compute_dtype).itemsize
    out_bytes = out_dtype.itemsize

    # --- glue (plain JAX, fused by XLA under jit) -----------------------------
    # See TODO(synk) at top of file: patch rearrange stays in the wrapper.
    xc = x.astype(compute_dtype)
    patches = xc.reshape(B, C, nH, P, nW, P)
    patches = patches.transpose(0, 2, 4, 1, 3, 5).reshape(M, K)  # rows=(b,nh,nw), cols=(c,kh,kw)

    w_flat = weight.reshape(E, K).T.astype(compute_dtype)        # (K, E)
    b_flat = bias.reshape(1, E).astype(jnp.float32)              # f32 epilogue add

    # Lane-dense / MXU-friendly padding.
    K_pad = _round_up(K, 128)
    E_pad = _round_up(E, 128)

    if tm is None:
        tm = _choose_tm(B, Np, M)
        # Cap tm so the double-buffered working set stays within ~24 MiB VMEM.
        fixed = 2 * K_pad * E_pad * in_bytes + 2 * E_pad * 4
        per_row = 2 * (K_pad * in_bytes + E_pad * out_bytes)
        budget = 24 * 1024 * 1024
        if fixed + tm * per_row > budget:
            tm = max(8, min(tm, max(budget - fixed, 0) // per_row) // 8 * 8)
    assert tm > 0 and tm % 8 == 0
    M_pad = _round_up(M, tm)

    if M_pad != M or K_pad != K:
        patches = jnp.pad(patches, ((0, M_pad - M), (0, K_pad - K)))
    if K_pad != K or E_pad != E:
        w_flat = jnp.pad(w_flat, ((0, K_pad - K), (0, E_pad - E)))
    if E_pad != E:
        b_flat = jnp.pad(b_flat, ((0, 0), (0, E_pad - E)))

    # VMEM working set: double-buffered patch+output tiles, resident weight+bias.
    vmem_need = (2 * tm * (K_pad * in_bytes + E_pad * out_bytes)
                 + 2 * K_pad * E_pad * in_bytes + 2 * E_pad * 4)
    cp_kwargs = dict(dimension_semantics=("parallel",))
    if vmem_need > 10 * 1024 * 1024:
        # v5e's scoped-VMEM default is only 16 MiB (v6e/v7x: 32 MiB); be explicit.
        cp_kwargs["vmem_limit_bytes"] = 32 * 1024 * 1024

    cost = pl.CostEstimate(
        flops=2 * M_pad * K_pad * E_pad + M_pad * E_pad,
        transcendentals=0,
        bytes_accessed=(M_pad * K_pad * in_bytes + K_pad * E_pad * in_bytes
                        + E_pad * 4 + M_pad * E_pad * out_bytes),
    )

    out = pl.pallas_call(
        _patch_embed_kernel,
        out_shape=jax.ShapeDtypeStruct((M_pad, E_pad), out_dtype),
        grid=(M_pad // tm,),
        in_specs=[
            pl.BlockSpec((tm, K_pad), lambda i: (i, 0)),      # streamed patch tile
            pl.BlockSpec((K_pad, E_pad), lambda i: (0, 0)),   # VMEM-resident weight
            pl.BlockSpec((1, E_pad), lambda i: (0, 0)),       # VMEM-resident bias
        ],
        out_specs=pl.BlockSpec((tm, E_pad), lambda i: (i, 0)),
        compiler_params=pltpu.CompilerParams(**cp_kwargs),
        cost_estimate=cost,
    )(patches, w_flat, b_flat)

    if M_pad != M or E_pad != E:
        out = out[:M, :E]   # only materializes a copy when padding was required
    return out.reshape(B, Np, E)


if __name__ == "__main__":
    # Small shapes consistent with the module's forward.
    B, C, H, W = 2, 4, 16, 16
    patch_size = 4
    embed_dim = 32

    key = jax.random.PRNGKey(0)
    kx, kw, kb = jax.random.split(key, 3)
    x = jax.random.normal(kx, (B, C, H, W), dtype=jnp.float32)
    # Deterministic synthetic Conv2d parameters (shapes per nn.Conv2d).
    weight = jax.random.normal(kw, (embed_dim, C, patch_size, patch_size),
                               dtype=jnp.float32) * 0.02
    bias = jax.random.normal(kb, (embed_dim,), dtype=jnp.float32) * 0.02

    # Plain-JAX strided-conv reference (matches the PyTorch module).
    ref = jax.lax.conv_general_dilated(
        x, weight, window_strides=(patch_size, patch_size), padding="VALID",
        dimension_numbers=("NCHW", "OIHW", "NCHW"))
    ref = ref + bias[None, :, None, None]
    ref = ref.reshape(B, embed_dim, -1).transpose(0, 2, 1)  # b c h w -> b (h w) c

    # Default path: bf16 compute, bf16 output, f32 MXU accumulation.
    out = patch_embedding(x, weight, bias, patch_size=patch_size)
    out = jax.block_until_ready(out)
    assert out.shape == (B, (H // patch_size) * (W // patch_size), embed_dim)
    assert out.dtype == jnp.bfloat16
    assert jnp.allclose(out.astype(jnp.float32), ref, atol=5e-2, rtol=5e-2), \
        "bf16 path mismatch"

    # Full-precision path: tight check of the kernel semantics.
    out_f32 = patch_embedding(x, weight, bias, patch_size=patch_size,
                              compute_dtype=jnp.float32, out_dtype=jnp.float32)
    out_f32 = jax.block_until_ready(out_f32)
    assert jnp.allclose(out_f32, ref, atol=1e-5, rtol=1e-5), "f32 path mismatch"

    print("KERNEL_OK")
</pallas_src>

<mosaic_0001>
module attributes {stable_mosaic.version = 11 : i64} {
  func.func @_patch_embed_kernel(%arg0: i32, %arg1: memref<16x128xbf16, #tpu.memory_space<vmem>>, %arg2: memref<128x128xbf16, #tpu.memory_space<vmem>>, %arg3: memref<1x128xf32, #tpu.memory_space<vmem>>, %arg4: memref<16x128xbf16, #tpu.memory_space<vmem>>) attributes {dimension_semantics = [#tpu.dimension_semantics<parallel>], iteration_bounds = array<i64: 2>, scalar_prefetch = 0 : i64, scratch_operands = 0 : i64, tpu.core_type = #tpu.core_type<tc>, window_params = [{transform_indices = @transform_0, window_bounds = array<i64: 16, 128>}, {pipeline_mode = #tpu.pipeline_mode<synchronous>, transform_indices = @transform_1, window_bounds = array<i64: 128, 128>}, {pipeline_mode = #tpu.pipeline_mode<synchronous>, transform_indices = @transform_2, window_bounds = array<i64: 1, 128>}, {transform_indices = @transform_3, window_bounds = array<i64: 16, 128>}]} {
    %c0 = arith.constant 0 : index
    %c0_0 = arith.constant 0 : index
    %0 = vector.load %arg1[%c0, %c0_0] : memref<16x128xbf16, #tpu.memory_space<vmem>>, vector<16x128xbf16>
    %c0_1 = arith.constant 0 : index
    %c0_2 = arith.constant 0 : index
    %1 = vector.load %arg2[%c0_1, %c0_2] : memref<128x128xbf16, #tpu.memory_space<vmem>>, vector<128x128xbf16>
    %cst = arith.constant dense<0.000000e+00> : vector<16x128xf32>
    %2 = tpu.matmul %0, %1, %cst {dimension_numbers = #tpu.dot_dimension_numbers<[1], [0], [0], [1], [0, 0, 1, 1], [], []>} : vector<16x128xbf16>, vector<128x128xbf16>, vector<16x128xf32> -> vector<16x128xf32>
    %c0_3 = arith.constant 0 : index
    %c0_4 = arith.constant 0 : index
    %3 = vector.load %arg3[%c0_3, %c0_4] : memref<1x128xf32, #tpu.memory_space<vmem>>, vector<1x128xf32>
    %4 = vector.broadcast %3 : vector<1x128xf32> to vector<16x128xf32>
    %5 = arith.addf %2, %4 : vector<16x128xf32>
    %6 = arith.truncf %5 : vector<16x128xf32> to vector<16x128xbf16>
    %c0_5 = arith.constant 0 : index
    %c0_6 = arith.constant 0 : index
    %7 = vector.load %arg4[%c0_5, %c0_6] : memref<16x128xbf16, #tpu.memory_space<vmem>>, vector<16x128xbf16>
    tpu.vector_store %arg4[%c0_5, %c0_6], %6 {strides = array<i32>} : memref<16x128xbf16, #tpu.memory_space<vmem>>, vector<16x128xbf16>,
    return
  }
  func.func @transform_0(%arg0: i32) -> (i32, i32) {
    %c0_i32 = arith.constant 0 : i32
    %c0_i32_0 = arith.constant 0 : i32
    return %arg0, %c0_i32 : i32, i32
  }
  func.func @transform_1(%arg0: i32) -> (i32, i32) {
    %c0_i32 = arith.constant 0 : i32
    %c0_i32_0 = arith.constant 0 : i32
    %c0_i32_1 = arith.constant 0 : i32
    return %c0_i32, %c0_i32_0 : i32, i32
  }
  func.func @transform_2(%arg0: i32) -> (i32, i32) {
    %c0_i32 = arith.constant 0 : i32
    %c0_i32_0 = arith.constant 0 : i32
    %c0_i32_1 = arith.constant 0 : i32
    return %c0_i32, %c0_i32_0 : i32, i32
  }
  func.func @transform_3(%arg0: i32) -> (i32, i32) {
    %c0_i32 = arith.constant 0 : i32
    %c0_i32_0 = arith.constant 0 : i32
    return %arg0, %c0_i32 : i32, i32
  }
}

</mosaic_0001>

<llo_original>
// kernel: patch_embedding.1
$region0: #{patch_embedding.1}
  #allocation0 [shape = 'u32[]', space=smem, size = 0x4, offset = 0x4, fixed_abs, tag = 'smem constant byte address 0x4 - core index']
  #allocation1 [shape = 'u32[144,128]{1,0:T(1,128)}', space=vmem, size = 0x12000, scoped, tag = 'internal scratch']
  %s0 = inlined_call_operand.vmem [shape: bf16[32,128], index: 0, kind: input, shape index: {}]
  %s1 = inlined_call_operand.vmem [shape: bf16[128,128], index: 1, kind: input, shape index: {}]
  %s2 = inlined_call_operand.vmem [shape: f32[1,128], index: 2, kind: input, shape index: {}]
  %s3 = inlined_call_operand.hbm [shape: bf16[32,128], index: 3, kind: output, shape index: {}]
  %s4 = sld [smem:[#allocation0]]
  $region45: #{patch_embedding.1} parent=0
    _
  %s6 = ssub.s32 1, %s4
  %s7 = scalar_select 0, %s6, %s4
  $region1: #{patch_embedding.1} parent=0
    #allocation2 [shape = 'u8[8192]{0}', space=vmem, size = 0x2000, scoped, tag = 'output window, operand 0']
    #allocation3 [shape = 's32[2]{0}', space=sflag, size = 0x8, scoped, tag = 'scoped memory for patch_embedding.1']
    %8 = vsyncpa [#allocation3], 0
    %s9 = scalar_lea.sflag [#allocation3], 1
    %10 = vsyncpa %s9, 0
    loop: start=0, step=1, limit=4
    $region2: #{patch_embedding.1} parent=1 // loop_pre_header
      _
    $region3: #{patch_embedding.1} parent=1 // loop_header
      %s12 = sphi 0, %s16
      %p13 = scmp.ge.s32.totalorder %s12, 4
      %s22 = sphi 0, %s24
      %s25 = sphi 0, %s22
      %s26 = sphi 0, %s25
      %s42 = sphi 0, %s26
      %s46 = sphi 0, %s46
      %s48 = sphi 0, %s46
      %s49 = sphi 0, %s48
      %s63 = sphi 0, %s49
      %s67 = sphi 0, %s67
      %s69 = sphi 0, %s67
      %s70 = sphi 0, %s69
      %s84 = sphi 0, %s70
      %s90 = sphi 0, %s92
      %s93 = sphi 0, %s90
      %s94 = sphi 0, %s93
      %s110 = sphi 0, %s94
    $region4: #{patch_embedding.1} parent=1 // loop_header_branch
      %15 = sbr.rel (%p13) target = $region8
    $region5: #{patch_embedding.1} parent=1 // loop_body
      %s17 = ssub.s32 %s12, 1
      %s18 = ssub.s32 %s12, 2
      %s19 = sadd.s32 %s12, 1
      %s20 = ssub.s32 %s12, %s19
      %p21 = scmp.eq.s32.totalorder %s20, 0
      %s23 = sadd.s32 %s22, 1
      %s24 = scalar_select %p21, %s22, %s23
      %p27 = pneg %p21
      %p28 = scmp.eq.s32.totalorder %s12, 1
      %p29 = por %p27, %p28
      %p30 = scmp.ne.s32.totalorder %s22, %s25
      %p31 = scmp.eq.s32.totalorder %s12, 0
      %p32 = por %p30, %p31
      %p33 = scmp.ne.s32.totalorder %s22, %s25
      %p34 = scmp.eq.s32.totalorder %s17, 1
      %p35 = por %p33, %p34
      %p36 = scmp.ne.s32.totalorder %s25, %s26
      %p37 = scmp.eq.s32.totalorder %s17, 0
      %p38 = por %p36, %p37
      %p39 = scmp.ne.s32.totalorder %s25, %s26
      %p40 = scmp.eq.s32.totalorder %s18, 1
      %p41 = por %p39, %p40
      %p43 = scmp.ne.s32.totalorder %s26, %s42
      %p44 = scmp.eq.s32.totalorder %s18, 0
      %p45 = por %p43, %p44
      %s47 = sadd.s32 %s46, 1
      %p50 = scmp.eq.s32.totalorder %s12, 1
      %p51 = scmp.ne.s32.totalorder %s46, %s48
      %p52 = scmp.eq.s32.totalorder %s12, 0
      %p53 = por %p51, %p52
      %p54 = scmp.ne.s32.totalorder %s46, %s48
      %p55 = scmp.eq.s32.totalorder %s17, 1
      %p56 = por %p54, %p55
      %p57 = scmp.ne.s32.totalorder %s48, %s49
      %p58 = scmp.eq.s32.totalorder %s17, 0
      %p59 = por %p57, %p58
      %p60 = scmp.ne.s32.totalorder %s48, %s49
      %p61 = scmp.eq.s32.totalorder %s18, 1
      %p62 = por %p60, %p61
      %p64 = scmp.ne.s32.totalorder %s49, %s63
      %p65 = scmp.eq.s32.totalorder %s18, 0
      %p66 = por %p64, %p65
      %s68 = sadd.s32 %s67, 1
      %p71 = scmp.eq.s32.totalorder %s12, 1
      %p72 = scmp.ne.s32.totalorder %s67, %s69
      %p73 = scmp.eq.s32.totalorder %s12, 0
      %p74 = por %p72, %p73
      %p75 = scmp.ne.s32.totalorder %s67, %s69
      %p76 = scmp.eq.s32.totalorder %s17, 1
      %p77 = por %p75, %p76
      %p78 = scmp.ne.s32.totalorder %s69, %s70
      %p79 = scmp.eq.s32.totalorder %s17, 0
      %p80 = por %p78, %p79
      %p81 = scmp.ne.s32.totalorder %s69, %s70
      %p82 = scmp.eq.s32.totalorder %s18, 1
      %p83 = por %p81, %p82
      %p85 = scmp.ne.s32.totalorder %s70, %s84
      %p86 = scmp.eq.s32.totalorder %s18, 0
      %p87 = por %p85, %p86
      %s88 = ssub.s32 %s12, %s19
      %p89 = scmp.eq.s32.totalorder %s88, 0
      %s91 = sadd.s32 %s90, 1
      %s92 = scalar_select %p89, %s90, %s91
      %p95 = pneg %p89
      %p96 = scmp.eq.s32.totalorder %s12, 1
      %p97 = por %p95, %p96
      %p98 = scmp.ne.s32.totalorder %s90, %s93
      %p99 = scmp.eq.s32.totalorder %s12, 0
      %p100 = por %p98, %p99
      %p101 = scmp.ne.s32.totalorder %s90, %s93
      %p102 = scmp.eq.s32.totalorder %s17, 1
      %p103 = por %p101, %p102
      %p104 = scmp.ne.s32.totalorder %s93, %s94
      %p105 = scmp.eq.s32.totalorder %s17, 0
      %p106 = por %p104, %p105
      %p107 = scmp.ne.s32.totalorder %s93, %s94
      %p108 = scmp.eq.s32.totalorder %s18, 1
      %p109 = por %p107, %p108
      %p111 = scmp.ne.s32.totalorder %s94, %s110
      %p112 = scmp.eq.s32.totalorder %s18, 0
      %p113 = por %p111, %p112
      %p114 = scmp.le.s32.totalorder 1, %s12
      %p115 = scmp.lt.s32.totalorder %s12, 3
      %p116 = pnand %p114, %p115
      %p117 = pneg %p116
      // Predicated region
      $region9: #{patch_embedding.1} parent=5 // pred_check
        _
      $region10: #{patch_embedding.1} parent=5 // pred_check_branch
        %119 = sbr.rel (%p116) target = $region12
      $region11: #{patch_embedding.1} parent=5 // pred_region
        %s120 = ssub.s32 %s12, 1
        // Predicated region
        $region13: #{patch_embedding.1} parent=11 // pred_check
          %p121 = pneg %p59
        $region14: #{patch_embedding.1} parent=11 // pred_check_branch
          %123 = sbr.rel (%p121) target = $region16
        $region15: #{patch_embedding.1} parent=11 // pred_region
          _
        $region16: #{patch_embedding.1} parent=11 // pred_fallthru
          _
        // Predicated region
        $region17: #{patch_embedding.1} parent=11 // pred_check
          %p124 = pneg %p80
        $region18: #{patch_embedding.1} parent=11 // pred_check_branch
          %126 = sbr.rel (%p124) target = $region20
        $region19: #{patch_embedding.1} parent=11 // pred_region
          _
        $region20: #{patch_embedding.1} parent=11 // pred_fallthru
          _
      $region12: #{patch_embedding.1} parent=5 // pred_fallthru
        _
      %p127 = scmp.lt.s32.totalorder %s12, 2
      // Predicated region
      $region21: #{patch_embedding.1} parent=5 // pred_check
        %p128 = pneg %p127
      $region22: #{patch_embedding.1} parent=5 // pred_check_branch
        %130 = sbr.rel (%p128) target = $region24
      $region23: #{patch_embedding.1} parent=5 // pred_region
        // Predicated region
        $region25: #{patch_embedding.1} parent=23 // pred_check
          %p131 = pneg %p32
        $region26: #{patch_embedding.1} parent=23 // pred_check_branch
          %133 = sbr.rel (%p131) target = $region28
        $region27: #{patch_embedding.1} parent=23 // pred_region
          %s134 = smul.u32 2, %s12
          %p135 = scmp.lt.s32.totalorder %s134, 3
          %s136 = scalar_select %p135, %s134, 3
          %s137 = smul.addr %s136, 4
          %s138 = scalar_lea.vmem %s0, %s137
          %s139 = smul.u32 2, %s12
        $region28: #{patch_embedding.1} parent=23 // pred_fallthru
          _
      $region24: #{patch_embedding.1} parent=5 // pred_fallthru
        _
      %p140 = scmp.le.s32.totalorder 1, %s12
      %p141 = scmp.lt.s32.totalorder %s12, 3
      %p142 = pnand %p140, %p141
      %p143 = pneg %p142
      // Predicated region
      $region29: #{patch_embedding.1} parent=5 // pred_check
        _
      $region30: #{patch_embedding.1} parent=5 // pred_check_branch
        %145 = sbr.rel (%p142) target = $region32
      $region31: #{patch_embedding.1} parent=5 // pred_region
        %s146 = ssub.s32 %s12, 1
        %s147 = smul.u32 2, %s17
        %p148 = scmp.lt.s32.totalorder %s147, 3
        %s149 = scalar_select %p148, %s147, 3
        %s150 = smul.addr %s149, 4
        %s151 = scalar_lea.vmem %s0, %s150
        %p152 = pneg %p38
        %p153 = pneg %p35
        %p154 = pneg %p59
        %p155 = pneg %p56
        %p156 = pneg %p80
        %p157 = pneg %p77
        %p158 = pneg %p106
        %p159 = pneg %p103
        %s160 = sand.u32 %s93, 1
        %s161 = scalar_lea.sflag [#allocation3], %s160
        %s162 = sand.u32 %s93, 1
        %s163 = smul.addr %s162, 8
        %s164 = scalar_lea.vmem [#allocation2], %s163
        %s165 = smul.u32 2, %s17
        %p166 = scmp.lt.s32.totalorder %s165, 3
        %s167 = scalar_select %p166, %s165, 3
        %s168 = smul.addr %s167, 4
        %s169 = scalar_lea.vmem %s0, %s168
        %s170 = smul.u32 2, %s17
        %s171 = smul.u32 2, %s17
        %v173 = vld [vmem:[%s169] sm:$0xf]
        %v174 = vld [vmem:[%s169 + $0x4] sm:$0xf]
        %v175 = vld [vmem:[%s1] sm:$0xf]
        %v176 = vld [vmem:[%s1 + $0x4] sm:$0xf]
        %v177 = vld [vmem:[%s1 + $0x8] sm:$0xf]
        %v178 = vld [vmem:[%s1 + $0xc] sm:$0xf]
        %v179 = vld [vmem:[%s1 + $0x10] sm:$0xf]
        %v180 = vld [vmem:[%s1 + $0x14] sm:$0xf]
        %v181 = vld [vmem:[%s1 + $0x18] sm:$0xf]
        %v182 = vld [vmem:[%s1 + $0x1c] sm:$0xf]
        %v183 = vld [vmem:[%s1 + $0x20] sm:$0xf]
        %v184 = vld [vmem:[%s1 + $0x24] sm:$0xf]
        %v185 = vld [vmem:[%s1 + $0x28] sm:$0xf]
        %v186 = vld [vmem:[%s1 + $0x2c] sm:$0xf]
        %v187 = vld [vmem:[%s1 + $0x30] sm:$0xf]
        %v188 = vld [vmem:[%s1 + $0x34] sm:$0xf]
        %v189 = vld [vmem:[%s1 + $0x38] sm:$0xf]
        %v190 = vld [vmem:[%s1 + $0x3c] sm:$0xf]
        %v191 = vld [vmem:[%s2] sm:$0x1]
        %v193 = vlaneseq
        %v194 = vshrl.u32 %v193, 7
        %v195 = vsub.s32 0, %v194
        %v196 = vrot.slane %v191, %v195
        %v200 = vunpack.c.l.b16 %v173
        %v201 = vunpack.c.l.b16 %v174
        %v202 = vpack.c.b16 %v201, %v200
        %v220 = vunpack.c.l.b16 %v175
        %v221 = vunpack.c.l.b16 %v176
        %v222 = vunpack.c.l.b16 %v177
        %v223 = vunpack.c.l.b16 %v178
        %v224 = vunpack.c.l.b16 %v179
        %v225 = vunpack.c.l.b16 %v180
        %v226 = vunpack.c.l.b16 %v181
        %v227 = vunpack.c.l.b16 %v182
        %v228 = vunpack.c.l.b16 %v183
        %v229 = vunpack.c.l.b16 %v184
        %v230 = vunpack.c.l.b16 %v185
        %v231 = vunpack.c.l.b16 %v186
        %v232 = vunpack.c.l.b16 %v187
        %v233 = vunpack.c.l.b16 %v188
        %v234 = vunpack.c.l.b16 %v189
        %v235 = vunpack.c.l.b16 %v190
        %v236 = vpack.c.b16 %v221, %v220
        %v237 = vpack.c.b16 %v223, %v222
        %v238 = vpack.c.b16 %v225, %v224
        %v239 = vpack.c.b16 %v227, %v226
        %v240 = vpack.c.b16 %v229, %v228
        %v241 = vpack.c.b16 %v231, %v230
        %v242 = vpack.c.b16 %v233, %v232
        %v243 = vpack.c.b16 %v235, %v234
        %252 = vmatprep.subr.bf16.mxu0 0
        %253 = vmatpush1.bf16.msra.mxu0 %v243
        %254 = vmatprep.subr.bf16.mxu0 0
        %255 = vmatpush1.bf16.msra.mxu0 %v242
        %256 = vmatprep.subr.bf16.mxu0 0
        %257 = vmatpush1.bf16.msra.mxu0 %v241
        %258 = vmatprep.subr.bf16.mxu0 0
        %259 = vmatpush1.bf16.msra.mxu0 %v240
        %260 = vmatprep.subr.bf16.mxu0 0
        %261 = vmatpush1.bf16.msra.mxu0 %v239
        %262 = vmatprep.subr.bf16.mxu0 0
        %263 = vmatpush1.bf16.msra.mxu0 %v238
        %264 = vmatprep.subr.bf16.mxu0 0
        %265 = vmatpush1.bf16.msra.mxu0 %v237
        %266 = vmatprep.subr.bf16.mxu0 0
        %267 = vmatpush1.bf16.msra.mxu0 %v236
        %268 = vmatprep.subr.bf16.mxu0 0
        %269 = vmatpush2.bf16.msra.mxu0 0
        %270 = vmatprep.subr.bf16.mxu0 0
        %271 = vmatpush2.bf16.msra.mxu0 0
        %272 = vmatprep.subr.bf16.mxu0 0
        %273 = vmatpush2.bf16.msra.mxu0 0
        %274 = vmatprep.subr.bf16.mxu0 0
        %275 = vmatpush2.bf16.msra.mxu0 0
        %276 = vmatprep.subr.bf16.mxu0 0
        %277 = vmatpush2.bf16.msra.mxu0 0
        %278 = vmatprep.subr.bf16.mxu0 0
        %279 = vmatpush2.bf16.msra.mxu0 0
        %280 = vmatprep.subr.bf16.mxu0 0
        %281 = vmatpush2.bf16.msra.mxu0 0
        %282 = vmatprep.subr.bf16.mxu0 0
        %283 = vmatpush2.bf16.msra.mxu0 0
        %284 = vmatprep.mubr.bf16.mxu0 0
        %285 = vmatmul.mubr.bf16.gmra.mxu0 %v202
        %v286 = vpop.f32.mrf.mxu0
        %v287 = vadd.f32 %v196, %v286
        %v288 = vpop.f32.mrf.mxu0
        %v289 = vpop.f32.mrf.mxu0
        %v290 = vadd.f32 %v196, %v289
        %v291 = vpop.f32.mrf.mxu0
        %292 = vdwg.mxu0
        %v293 = vpack.c.bf16 %v290, %v287
        %v295 = vunpack.c.l.b16 %v293
        %v296 = vunpack.c.h.b16 %v293
        %v297 = vpack.c.b16 %v295, %v295
        %v298 = vpack.c.b16 %v296, %v296
        %301 = vst [vmem:[%s164] sm:$0xf] %v297
        %302 = vst [vmem:[%s164 + $0x4] sm:$0xf] %v298
        %s303 = sand.u32 %s93, 1
        %s304 = scalar_lea.sflag [#allocation3], %s303
        %s305 = sand.u32 %s93, 1
        %s306 = smul.addr %s305, 8
        %s307 = scalar_lea.vmem [#allocation2], %s306
        // Predicated region
        $region33: #{patch_embedding.1} parent=31 // pred_check
          %p308 = pneg %p103
        $region34: #{patch_embedding.1} parent=31 // pred_check_branch
          %310 = sbr.rel (%p308) target = $region36
        $region35: #{patch_embedding.1} parent=31 // pred_region
          %s311 = smul.u32 2, %s17
          %s313 = ssub.s32 128, 128
          %314 = vsyncadd %s304, %s313
          %s315 = smul.addr %s311, 64
          %s316 = scalar_lea.hbm %s3, %s315
          %s317 = sshll.u32 %s307, 4
          %s318 = int_to_ptr.vmem [resolvable:$true] %s317
          %323 = dma.vmem_to_hbm [thread:$0]  %s318, 128, %s316, %s304, 64, 64, 4
        $region36: #{patch_embedding.1} parent=31 // pred_fallthru
          _
      $region32: #{patch_embedding.1} parent=5 // pred_fallthru
        _
      %p324 = scmp.le.s32.totalorder 2, %s12
      // Predicated region
      $region37: #{patch_embedding.1} parent=5 // pred_check
        %p325 = pneg %p324
      $region38: #{patch_embedding.1} parent=5 // pred_check_branch
        %327 = sbr.rel (%p325) target = $region40
      $region39: #{patch_embedding.1} parent=5 // pred_region
        %s328 = ssub.s32 %s12, 2
        // Predicated region
        $region41: #{patch_embedding.1} parent=39 // pred_check
          %p329 = pneg %p109
        $region42: #{patch_embedding.1} parent=39 // pred_check_branch
          %331 = sbr.rel (%p329) target = $region44
        $region43: #{patch_embedding.1} parent=39 // pred_region
          %s332 = sand.u32 %s94, 1
          %s333 = scalar_lea.sflag [#allocation3], %s332
          %s334 = sand.u32 %s94, 1
          %s335 = smul.addr %s334, 8
          %s336 = scalar_lea.vmem [#allocation2], %s335
          %337 = dma.done %s333, 128
        $region44: #{patch_embedding.1} parent=39 // pred_fallthru
          _
      $region40: #{patch_embedding.1} parent=5 // pred_fallthru
        _
    $region6: #{patch_embedding.1} parent=1 // loop_footer
      %s16 = sadd.s32 1, %s12
    $region7: #{patch_embedding.1} parent=1 // loop_footer_branch
      %11 = sbr.rel target = $region3
    $region8: #{patch_embedding.1} parent=1 // loop_exit
      _
    %338 = vsyncpa [#allocation3], 1
    %s339 = scalar_lea.sflag [#allocation3], 1
    %340 = vsyncpa %s339, 1

</llo_original>
